<compile_context>
chip_gen: v5e
topology: v5e:2x2
jax: 0.10.0
libtpu: 0.0.40
codegen_flags: <defaults>
</compile_context>

<pallas_src>
import jax
import jax.numpy as jnp
from jax.experimental import pallas as pl
from jax.experimental.pallas import tpu as pltpu

LANE = 128
_STATIC_T = 16          # fully-unrolled (and logb-hoisted) path for T <= this


def act_r_kernel(w_ref, sp_ref, out_ref):
    T, W = sp_ref.shape                      # W = lane-block width (multiple of 128)
    n_inner = W // LANE

    # ---- scalar parameters (SMEM), hoisted out of all loops ----
    a = w_ref[0]
    c = w_ref[1]
    s = w_ref[2]
    tau = w_ref[3]
    h = w_ref[4]
    scale = 86400.0 * h
    inv_s = 1.0 / s

    row_idx = jax.lax.broadcasted_iota(jnp.int32, (T, LANE), 0)   # j index per row

    for ci in range(n_inner):                                     # static lane-chunk loop
        c0 = ci * LANE
        sp = sp_ref[:, c0:c0 + LANE]                               # [T, 128] (static slice)

        e = jnp.zeros((T, LANE), jnp.float32)                      # e[j] = exp(m[j]); exp(m[0]) = 0

        if T <= _STATIC_T:
            # Dense pre-pass: logb[i, j, :] = log(clamp((sp[i]-sp[j])*scale, 1))
            # (sp-only work issued as one big EUP batch, off the serial chain).
            diff = sp[:, None, :] - sp[None, :, :]                 # [T, T, 128]
            logb = jnp.log(jnp.maximum(diff * scale, 1.0))         # [T, T, 128]
            for i in range(1, T):                                  # fully static recurrence
                expo = -(c * e + a)                                # [T, 128]
                term = jnp.where(row_idx < i, jnp.exp(expo * logb[i]), 0.0)
                s_i = jnp.sum(term, axis=0, keepdims=True)         # S[i] = exp(m[i]), [1, 128]
                e = jnp.where(row_idx == i, s_i, e)
        else:
            # Large-T path: per-step logb (computed before touching e), partial unroll.
            def body(i, e_carry):
                sp_i = jax.lax.dynamic_slice_in_dim(sp, i, 1, axis=0)        # [1, 128]
                logb_i = jnp.log(jnp.maximum((sp_i - sp) * scale, 1.0))      # [T, 128]
                expo = -(c * e_carry + a)
                term = jnp.where(row_idx < i, jnp.exp(expo * logb_i), 0.0)
                s_i = jnp.sum(term, axis=0, keepdims=True)
                return jnp.where(row_idx == i, s_i, e_carry)
            e = jax.lax.fori_loop(1, T, body, e, unroll=4)

        # ---- epilogue: one dense log + sigmoid + unmasked store per chunk ----
        m = jnp.log(e[1:])                                         # [T-1, 128]
        out_ref[:, c0:c0 + LANE] = 1.0 / (1.0 + jnp.exp((tau - m) * inv_s))


def act_r_forward(w, sp, lane_block=4 * LANE):
    """w: f32[5], sp: f32[T, B, 1]  ->  f32[T-1, B, 1]"""
    T, B, F = sp.shape
    assert F == 1 and T >= 2
    sp2d = sp[..., 0].astype(jnp.float32)                          # [T, B]

    # Batch -> lane axis, padded to a multiple of 128.
    Bp = ((B + LANE - 1) // LANE) * LANE
    # Lane-block width per grid step (sweepable: 512/1024/2048). Shrink it when
    # that would leave a single grid step but >=2 are possible (v7x megacore).
    W = min(lane_block, Bp)
    if Bp // W < 2 and W > LANE:
        W = max(LANE, (Bp // 2) // LANE * LANE)
    Bp2 = ((Bp + W - 1) // W) * W
    if Bp2 != B:
        sp2d = jnp.pad(sp2d, ((0, 0), (0, Bp2 - B)))
    n_blocks = Bp2 // W

    grid_spec = pltpu.PrefetchScalarGridSpec(
        num_scalar_prefetch=0,
        grid=(n_blocks,),                                          # independent lane blocks
        in_specs=[
            pl.BlockSpec(memory_space=pltpu.MemorySpace.SMEM),     # w (5 scalars)
            pl.BlockSpec((T, W), lambda b: (0, b)),                # sp lane block
        ],
        out_specs=pl.BlockSpec((T - 1, W), lambda b: (0, b)),      # full-extent first dim
    )
    cost = pl.CostEstimate(
        flops=int(10 * T * T * Bp2),
        transcendentals=int(2 * T * T * Bp2),
        bytes_accessed=int(4 * (T + (T - 1)) * Bp2),
    )
    out = pl.pallas_call(
        act_r_kernel,
        out_shape=jax.ShapeDtypeStruct((T - 1, Bp2), jnp.float32),
        grid_spec=grid_spec,
        compiler_params=pltpu.CompilerParams(
            dimension_semantics=("parallel",)),                    # megacore over batch blocks
        cost_estimate=cost,
    )(w.astype(jnp.float32), sp2d)
    return out[:, :B, None]                                        # [T-1, B, 1]


# ---------------- pure-JAX reference (mirrors the torch loop) ----------------
def act_r_ref(w, sp):
    T, B, _ = sp.shape
    sp2 = sp[..., 0]
    exp_m = [jnp.zeros((B,), jnp.float32)]        # exp(m[0]) = exp(-inf) = 0
    outs = []
    for i in range(1, T):
        total = jnp.zeros((B,), jnp.float32)
        for j in range(i):
            base = jnp.maximum((sp2[i] - sp2[j]) * 86400.0 * w[4], 1.0)
            total = total + base ** (-(w[1] * exp_m[j] + w[0]))
        m_i = jnp.log(total)
        exp_m.append(jnp.exp(m_i))
        outs.append(1.0 / (1.0 + jnp.exp((w[3] - m_i) / w[2])))
    return jnp.stack(outs)[..., None]             # [T-1, B, 1]


if __name__ == "__main__":
    T, B = 8, 4
    key = jax.random.PRNGKey(0)
    # review times (in days), strictly increasing per item
    gaps = jax.random.uniform(key, (T, B, 1), jnp.float32, minval=0.1, maxval=5.0)
    sp = jnp.cumsum(gaps, axis=0)

    # ACT_R.init_w = [a, c, s, tau, h]
    w = jnp.array([0.176786766570677, 0.216967308403809, 0.254893976981164,
                   -0.704205679427144, 0.025], jnp.float32)

    out = jax.block_until_ready(act_r_forward(w, sp))
    ref = act_r_ref(w, sp)

    assert out.shape == (T - 1, B, 1), out.shape
    assert jnp.allclose(out, ref, rtol=1e-4, atol=1e-4), "outputs mismatch vs reference"
    print("KERNEL_OK")
</pallas_src>

<mosaic_0001>
module attributes {stable_mosaic.version = 11 : i64} {
  func.func @act_r_kernel(%arg0: i32, %arg1: memref<5xf32, #tpu.memory_space<smem>>, %arg2: memref<8x128xf32, #tpu.memory_space<vmem>>, %arg3: memref<7x128xf32, #tpu.memory_space<vmem>>) attributes {dimension_semantics = [#tpu.dimension_semantics<parallel>], iteration_bounds = array<i64: 1>, scalar_prefetch = 0 : i64, scratch_operands = 0 : i64, tpu.core_type = #tpu.core_type<tc>, window_params = [{transform_indices = @transform_0, window_bounds = array<i64: 5>}, {transform_indices = @transform_1, window_bounds = array<i64: 8, 128>}, {transform_indices = @transform_2, window_bounds = array<i64: 7, 128>}]} {
    %c0 = arith.constant 0 : index
    %0 = memref.load %arg1[%c0] : memref<5xf32, #tpu.memory_space<smem>>
    %c1 = arith.constant 1 : index
    %1 = memref.load %arg1[%c1] : memref<5xf32, #tpu.memory_space<smem>>
    %c2 = arith.constant 2 : index
    %2 = memref.load %arg1[%c2] : memref<5xf32, #tpu.memory_space<smem>>
    %c3 = arith.constant 3 : index
    %3 = memref.load %arg1[%c3] : memref<5xf32, #tpu.memory_space<smem>>
    %c4 = arith.constant 4 : index
    %4 = memref.load %arg1[%c4] : memref<5xf32, #tpu.memory_space<smem>>
    %cst = arith.constant 8.640000e+04 : f32
    %5 = arith.mulf %cst, %4 : f32
    %cst_0 = arith.constant 1.000000e+00 : f32
    %6 = arith.divf %cst_0, %2 : f32
    %7 = tpu.iota {dimensions = array<i32: 0>} : vector<8x128xi32>
    %c0_1 = arith.constant 0 : index
    %c0_2 = arith.constant 0 : index
    %8 = vector.load %arg2[%c0_1, %c0_2] : memref<8x128xf32, #tpu.memory_space<vmem>>, vector<8x128xf32>
    %cst_3 = arith.constant 0.000000e+00 : f32
    %9 = vector.broadcast %cst_3 : f32 to vector<8x128xf32>
    %10 = vector.shape_cast %8 : vector<8x128xf32> to vector<8x1x128xf32>
    %11 = vector.shape_cast %8 : vector<8x128xf32> to vector<1x8x128xf32>
    %12 = vector.broadcast %10 : vector<8x1x128xf32> to vector<8x8x128xf32>
    %13 = vector.broadcast %11 : vector<1x8x128xf32> to vector<8x8x128xf32>
    %14 = arith.subf %12, %13 : vector<8x8x128xf32>
    %15 = vector.broadcast %5 : f32 to vector<8x8x128xf32>
    %16 = arith.mulf %14, %15 : vector<8x8x128xf32>
    %cst_4 = arith.constant 1.000000e+00 : f32
    %17 = vector.broadcast %cst_4 : f32 to vector<8x8x128xf32>
    %18 = arith.maximumf %16, %17 : vector<8x8x128xf32>
    %19 = math.log %18 : vector<8x8x128xf32>
    %20 = vector.broadcast %1 : f32 to vector<8x128xf32>
    %21 = arith.mulf %20, %9 : vector<8x128xf32>
    %22 = vector.broadcast %0 : f32 to vector<8x128xf32>
    %23 = arith.addf %21, %22 : vector<8x128xf32>
    %cst_5 = arith.constant 0.000000e+00 : f32
    %24 = vector.broadcast %cst_5 : f32 to vector<8x128xf32>
    %25 = arith.subf %24, %23 : vector<8x128xf32>
    %c1_i32 = arith.constant 1 : i32
    %26 = vector.broadcast %c1_i32 : i32 to vector<8x128xi32>
    %27 = arith.cmpi slt, %7, %26 : vector<8x128xi32>
    %28 = vector.extract_strided_slice %19 {offsets = [1, 0, 0], sizes = [1, 8, 128], strides = [1, 1, 1]} : vector<8x8x128xf32> to vector<1x8x128xf32>
    %29 = vector.shape_cast %28 : vector<1x8x128xf32> to vector<8x128xf32>
    %30 = arith.mulf %25, %29 : vector<8x128xf32>
    %31 = math.exp %30 : vector<8x128xf32>
    %cst_6 = arith.constant 0.000000e+00 : f32
    %32 = vector.broadcast %cst_6 : f32 to vector<8x128xf32>
    %33 = arith.select %27, %31, %32 : vector<8x128xi1>, vector<8x128xf32>
    %cst_7 = arith.constant dense<0.000000e+00> : vector<128xf32>
    %34 = vector.multi_reduction <add>, %33, %cst_7 [0] : vector<8x128xf32> to vector<128xf32>
    %35 = vector.shape_cast %34 : vector<128xf32> to vector<1x128xf32>
    %c1_i32_8 = arith.constant 1 : i32
    %36 = vector.broadcast %c1_i32_8 : i32 to vector<8x128xi32>
    %37 = arith.cmpi eq, %7, %36 : vector<8x128xi32>
    %38 = vector.shape_cast %35 : vector<1x128xf32> to vector<1x128xf32>
    %39 = vector.broadcast %38 : vector<1x128xf32> to vector<8x128xf32>
    %40 = arith.select %37, %39, %9 : vector<8x128xi1>, vector<8x128xf32>
    %41 = vector.broadcast %1 : f32 to vector<8x128xf32>
    %42 = arith.mulf %41, %40 : vector<8x128xf32>
    %43 = vector.broadcast %0 : f32 to vector<8x128xf32>
    %44 = arith.addf %42, %43 : vector<8x128xf32>
    %cst_9 = arith.constant 0.000000e+00 : f32
    %45 = vector.broadcast %cst_9 : f32 to vector<8x128xf32>
    %46 = arith.subf %45, %44 : vector<8x128xf32>
    %c2_i32 = arith.constant 2 : i32
    %47 = vector.broadcast %c2_i32 : i32 to vector<8x128xi32>
    %48 = arith.cmpi slt, %7, %47 : vector<8x128xi32>
    %49 = vector.extract_strided_slice %19 {offsets = [2, 0, 0], sizes = [1, 8, 128], strides = [1, 1, 1]} : vector<8x8x128xf32> to vector<1x8x128xf32>
    %50 = vector.shape_cast %49 : vector<1x8x128xf32> to vector<8x128xf32>
    %51 = arith.mulf %46, %50 : vector<8x128xf32>
    %52 = math.exp %51 : vector<8x128xf32>
    %cst_10 = arith.constant 0.000000e+00 : f32
    %53 = vector.broadcast %cst_10 : f32 to vector<8x128xf32>
    %54 = arith.select %48, %52, %53 : vector<8x128xi1>, vector<8x128xf32>
    %cst_11 = arith.constant dense<0.000000e+00> : vector<128xf32>
    %55 = vector.multi_reduction <add>, %54, %cst_11 [0] : vector<8x128xf32> to vector<128xf32>
    %56 = vector.shape_cast %55 : vector<128xf32> to vector<1x128xf32>
    %c2_i32_12 = arith.constant 2 : i32
    %57 = vector.broadcast %c2_i32_12 : i32 to vector<8x128xi32>
    %58 = arith.cmpi eq, %7, %57 : vector<8x128xi32>
    %59 = vector.shape_cast %56 : vector<1x128xf32> to vector<1x128xf32>
    %60 = vector.broadcast %59 : vector<1x128xf32> to vector<8x128xf32>
    %61 = arith.select %58, %60, %40 : vector<8x128xi1>, vector<8x128xf32>
    %62 = vector.broadcast %1 : f32 to vector<8x128xf32>
    %63 = arith.mulf %62, %61 : vector<8x128xf32>
    %64 = vector.broadcast %0 : f32 to vector<8x128xf32>
    %65 = arith.addf %63, %64 : vector<8x128xf32>
    %cst_13 = arith.constant 0.000000e+00 : f32
    %66 = vector.broadcast %cst_13 : f32 to vector<8x128xf32>
    %67 = arith.subf %66, %65 : vector<8x128xf32>
    %c3_i32 = arith.constant 3 : i32
    %68 = vector.broadcast %c3_i32 : i32 to vector<8x128xi32>
    %69 = arith.cmpi slt, %7, %68 : vector<8x128xi32>
    %70 = vector.extract_strided_slice %19 {offsets = [3, 0, 0], sizes = [1, 8, 128], strides = [1, 1, 1]} : vector<8x8x128xf32> to vector<1x8x128xf32>
    %71 = vector.shape_cast %70 : vector<1x8x128xf32> to vector<8x128xf32>
    %72 = arith.mulf %67, %71 : vector<8x128xf32>
    %73 = math.exp %72 : vector<8x128xf32>
    %cst_14 = arith.constant 0.000000e+00 : f32
    %74 = vector.broadcast %cst_14 : f32 to vector<8x128xf32>
    %75 = arith.select %69, %73, %74 : vector<8x128xi1>, vector<8x128xf32>
    %cst_15 = arith.constant dense<0.000000e+00> : vector<128xf32>
    %76 = vector.multi_reduction <add>, %75, %cst_15 [0] : vector<8x128xf32> to vector<128xf32>
    %77 = vector.shape_cast %76 : vector<128xf32> to vector<1x128xf32>
    %c3_i32_16 = arith.constant 3 : i32
    %78 = vector.broadcast %c3_i32_16 : i32 to vector<8x128xi32>
    %79 = arith.cmpi eq, %7, %78 : vector<8x128xi32>
    %80 = vector.shape_cast %77 : vector<1x128xf32> to vector<1x128xf32>
    %81 = vector.broadcast %80 : vector<1x128xf32> to vector<8x128xf32>
    %82 = arith.select %79, %81, %61 : vector<8x128xi1>, vector<8x128xf32>
    %83 = vector.broadcast %1 : f32 to vector<8x128xf32>
    %84 = arith.mulf %83, %82 : vector<8x128xf32>
    %85 = vector.broadcast %0 : f32 to vector<8x128xf32>
    %86 = arith.addf %84, %85 : vector<8x128xf32>
    %cst_17 = arith.constant 0.000000e+00 : f32
    %87 = vector.broadcast %cst_17 : f32 to vector<8x128xf32>
    %88 = arith.subf %87, %86 : vector<8x128xf32>
    %c4_i32 = arith.constant 4 : i32
    %89 = vector.broadcast %c4_i32 : i32 to vector<8x128xi32>
    %90 = arith.cmpi slt, %7, %89 : vector<8x128xi32>
    %91 = vector.extract_strided_slice %19 {offsets = [4, 0, 0], sizes = [1, 8, 128], strides = [1, 1, 1]} : vector<8x8x128xf32> to vector<1x8x128xf32>
    %92 = vector.shape_cast %91 : vector<1x8x128xf32> to vector<8x128xf32>
    %93 = arith.mulf %88, %92 : vector<8x128xf32>
    %94 = math.exp %93 : vector<8x128xf32>
    %cst_18 = arith.constant 0.000000e+00 : f32
    %95 = vector.broadcast %cst_18 : f32 to vector<8x128xf32>
    %96 = arith.select %90, %94, %95 : vector<8x128xi1>, vector<8x128xf32>
    %cst_19 = arith.constant dense<0.000000e+00> : vector<128xf32>
    %97 = vector.multi_reduction <add>, %96, %cst_19 [0] : vector<8x128xf32> to vector<128xf32>
    %98 = vector.shape_cast %97 : vector<128xf32> to vector<1x128xf32>
    %c4_i32_20 = arith.constant 4 : i32
    %99 = vector.broadcast %c4_i32_20 : i32 to vector<8x128xi32>
    %100 = arith.cmpi eq, %7, %99 : vector<8x128xi32>
    %101 = vector.shape_cast %98 : vector<1x128xf32> to vector<1x128xf32>
    %102 = vector.broadcast %101 : vector<1x128xf32> to vector<8x128xf32>
    %103 = arith.select %100, %102, %82 : vector<8x128xi1>, vector<8x128xf32>
    %104 = vector.broadcast %1 : f32 to vector<8x128xf32>
    %105 = arith.mulf %104, %103 : vector<8x128xf32>
    %106 = vector.broadcast %0 : f32 to vector<8x128xf32>
    %107 = arith.addf %105, %106 : vector<8x128xf32>
    %cst_21 = arith.constant 0.000000e+00 : f32
    %108 = vector.broadcast %cst_21 : f32 to vector<8x128xf32>
    %109 = arith.subf %108, %107 : vector<8x128xf32>
    %c5_i32 = arith.constant 5 : i32
    %110 = vector.broadcast %c5_i32 : i32 to vector<8x128xi32>
    %111 = arith.cmpi slt, %7, %110 : vector<8x128xi32>
    %112 = vector.extract_strided_slice %19 {offsets = [5, 0, 0], sizes = [1, 8, 128], strides = [1, 1, 1]} : vector<8x8x128xf32> to vector<1x8x128xf32>
    %113 = vector.shape_cast %112 : vector<1x8x128xf32> to vector<8x128xf32>
    %114 = arith.mulf %109, %113 : vector<8x128xf32>
    %115 = math.exp %114 : vector<8x128xf32>
    %cst_22 = arith.constant 0.000000e+00 : f32
    %116 = vector.broadcast %cst_22 : f32 to vector<8x128xf32>
    %117 = arith.select %111, %115, %116 : vector<8x128xi1>, vector<8x128xf32>
    %cst_23 = arith.constant dense<0.000000e+00> : vector<128xf32>
    %118 = vector.multi_reduction <add>, %117, %cst_23 [0] : vector<8x128xf32> to vector<128xf32>
    %119 = vector.shape_cast %118 : vector<128xf32> to vector<1x128xf32>
    %c5_i32_24 = arith.constant 5 : i32
    %120 = vector.broadcast %c5_i32_24 : i32 to vector<8x128xi32>
    %121 = arith.cmpi eq, %7, %120 : vector<8x128xi32>
    %122 = vector.shape_cast %119 : vector<1x128xf32> to vector<1x128xf32>
    %123 = vector.broadcast %122 : vector<1x128xf32> to vector<8x128xf32>
    %124 = arith.select %121, %123, %103 : vector<8x128xi1>, vector<8x128xf32>
    %125 = vector.broadcast %1 : f32 to vector<8x128xf32>
    %126 = arith.mulf %125, %124 : vector<8x128xf32>
    %127 = vector.broadcast %0 : f32 to vector<8x128xf32>
    %128 = arith.addf %126, %127 : vector<8x128xf32>
    %cst_25 = arith.constant 0.000000e+00 : f32
    %129 = vector.broadcast %cst_25 : f32 to vector<8x128xf32>
    %130 = arith.subf %129, %128 : vector<8x128xf32>
    %c6_i32 = arith.constant 6 : i32
    %131 = vector.broadcast %c6_i32 : i32 to vector<8x128xi32>
    %132 = arith.cmpi slt, %7, %131 : vector<8x128xi32>
    %133 = vector.extract_strided_slice %19 {offsets = [6, 0, 0], sizes = [1, 8, 128], strides = [1, 1, 1]} : vector<8x8x128xf32> to vector<1x8x128xf32>
    %134 = vector.shape_cast %133 : vector<1x8x128xf32> to vector<8x128xf32>
    %135 = arith.mulf %130, %134 : vector<8x128xf32>
    %136 = math.exp %135 : vector<8x128xf32>
    %cst_26 = arith.constant 0.000000e+00 : f32
    %137 = vector.broadcast %cst_26 : f32 to vector<8x128xf32>
    %138 = arith.select %132, %136, %137 : vector<8x128xi1>, vector<8x128xf32>
    %cst_27 = arith.constant dense<0.000000e+00> : vector<128xf32>
    %139 = vector.multi_reduction <add>, %138, %cst_27 [0] : vector<8x128xf32> to vector<128xf32>
    %140 = vector.shape_cast %139 : vector<128xf32> to vector<1x128xf32>
    %c6_i32_28 = arith.constant 6 : i32
    %141 = vector.broadcast %c6_i32_28 : i32 to vector<8x128xi32>
    %142 = arith.cmpi eq, %7, %141 : vector<8x128xi32>
    %143 = vector.shape_cast %140 : vector<1x128xf32> to vector<1x128xf32>
    %144 = vector.broadcast %143 : vector<1x128xf32> to vector<8x128xf32>
    %145 = arith.select %142, %144, %124 : vector<8x128xi1>, vector<8x128xf32>
    %146 = vector.broadcast %1 : f32 to vector<8x128xf32>
    %147 = arith.mulf %146, %145 : vector<8x128xf32>
    %148 = vector.broadcast %0 : f32 to vector<8x128xf32>
    %149 = arith.addf %147, %148 : vector<8x128xf32>
    %cst_29 = arith.constant 0.000000e+00 : f32
    %150 = vector.broadcast %cst_29 : f32 to vector<8x128xf32>
    %151 = arith.subf %150, %149 : vector<8x128xf32>
    %c7_i32 = arith.constant 7 : i32
    %152 = vector.broadcast %c7_i32 : i32 to vector<8x128xi32>
    %153 = arith.cmpi slt, %7, %152 : vector<8x128xi32>
    %154 = vector.extract_strided_slice %19 {offsets = [7, 0, 0], sizes = [1, 8, 128], strides = [1, 1, 1]} : vector<8x8x128xf32> to vector<1x8x128xf32>
    %155 = vector.shape_cast %154 : vector<1x8x128xf32> to vector<8x128xf32>
    %156 = arith.mulf %151, %155 : vector<8x128xf32>
    %157 = math.exp %156 : vector<8x128xf32>
    %cst_30 = arith.constant 0.000000e+00 : f32
    %158 = vector.broadcast %cst_30 : f32 to vector<8x128xf32>
    %159 = arith.select %153, %157, %158 : vector<8x128xi1>, vector<8x128xf32>
    %cst_31 = arith.constant dense<0.000000e+00> : vector<128xf32>
    %160 = vector.multi_reduction <add>, %159, %cst_31 [0] : vector<8x128xf32> to vector<128xf32>
    %161 = vector.shape_cast %160 : vector<128xf32> to vector<1x128xf32>
    %c7_i32_32 = arith.constant 7 : i32
    %162 = vector.broadcast %c7_i32_32 : i32 to vector<8x128xi32>
    %163 = arith.cmpi eq, %7, %162 : vector<8x128xi32>
    %164 = vector.shape_cast %161 : vector<1x128xf32> to vector<1x128xf32>
    %165 = vector.broadcast %164 : vector<1x128xf32> to vector<8x128xf32>
    %166 = arith.select %163, %165, %145 : vector<8x128xi1>, vector<8x128xf32>
    %167 = vector.extract_strided_slice %166 {offsets = [1, 0], sizes = [7, 128], strides = [1, 1]} : vector<8x128xf32> to vector<7x128xf32>
    %168 = math.log %167 : vector<7x128xf32>
    %169 = vector.broadcast %3 : f32 to vector<7x128xf32>
    %170 = arith.subf %169, %168 : vector<7x128xf32>
    %171 = vector.broadcast %6 : f32 to vector<7x128xf32>
    %172 = arith.mulf %170, %171 : vector<7x128xf32>
    %173 = math.exp %172 : vector<7x128xf32>
    %cst_33 = arith.constant 1.000000e+00 : f32
    %174 = vector.broadcast %cst_33 : f32 to vector<7x128xf32>
    %175 = arith.addf %174, %173 : vector<7x128xf32>
    %cst_34 = arith.constant 1.000000e+00 : f32
    %176 = vector.broadcast %cst_34 : f32 to vector<7x128xf32>
    %177 = arith.divf %176, %175 : vector<7x128xf32>
    %c0_35 = arith.constant 0 : index
    %c0_36 = arith.constant 0 : index
    %178 = vector.load %arg3[%c0_35, %c0_36] : memref<7x128xf32, #tpu.memory_space<vmem>>, vector<7x128xf32>
    tpu.vector_store %arg3[%c0_35, %c0_36], %177 {strides = array<i32>} : memref<7x128xf32, #tpu.memory_space<vmem>>, vector<7x128xf32>,
    return
  }
  func.func @transform_0(%arg0: i32) -> i32 {
    %c0_i32 = arith.constant 0 : i32
    %c0_i32_0 = arith.constant 0 : i32
    return %c0_i32 : i32
  }
  func.func @transform_1(%arg0: i32) -> (i32, i32) {
    %c0_i32 = arith.constant 0 : i32
    %c0_i32_0 = arith.constant 0 : i32
    return %c0_i32, %arg0 : i32, i32
  }
  func.func @transform_2(%arg0: i32) -> (i32, i32) {
    %c0_i32 = arith.constant 0 : i32
    %c0_i32_0 = arith.constant 0 : i32
    return %c0_i32, %arg0 : i32, i32
  }
}

</mosaic_0001>

<llo_original>
// kernel: tpu_custom_call.1
$region0: #{tpu_custom_call.1}
  #allocation0 [shape = 'u32[]', space=smem, size = 0x4, offset = 0x4, fixed_abs, tag = 'smem constant byte address 0x4 - core index']
  #allocation1 [shape = 'u32[72,128]{1,0:T(1,128)}', space=vmem, size = 0x9000, scoped, tag = 'internal scratch']
  %s0 = inlined_call_operand.hbm [shape: f32[5], index: 0, kind: input, shape index: {}]
  %s1 = inlined_call_operand.hbm [shape: f32[8,128], index: 1, kind: input, shape index: {}]
  %s2 = inlined_call_operand.hbm [shape: f32[7,128], index: 2, kind: output, shape index: {}]
  %s3 = sld [smem:[#allocation0]]
  $region26: #{tpu_custom_call.1} parent=0
    _
  %s5 = ssub.s32 1, %s3
  %s6 = scalar_select 0, %s5, %s3
  $region1: #{tpu_custom_call.1} parent=0
    #allocation2 [shape = 'u8[512]{0}', space=smem, size = 0x200, scoped, tag = 'input window, operand 0, single buffered']
    #allocation3 [shape = 's32[1]{0}', space=sflag, size = 0x4, scoped, tag = 'scoped memory for tpu_custom_call.1']
    #allocation4 [shape = 's32[1]{0}', space=sflag, size = 0x4, scoped, tag = 'scoped memory for tpu_custom_call.1']
    #allocation5 [shape = 's32[1]{0}', space=sflag, size = 0x4, scoped, tag = 'scoped memory for tpu_custom_call.1']
    #allocation6 [shape = 'u8[4096]{0}', space=vmem, size = 0x1000, scoped, tag = 'input window, operand 1, single buffered']
    #allocation7 [shape = 'u8[4096]{0}', space=vmem, size = 0x1000, scoped, tag = 'output window, operand 0, single buffered']
    %7 = vsyncpa [#allocation5], 0
    %8 = vsyncpa [#allocation3], 0
    %9 = vsyncpa [#allocation4], 0
    // Predicated region
    $region2: #{tpu_custom_call.1} parent=1 // pred_check
      _
    $region3: #{tpu_custom_call.1} parent=1 // pred_check_branch
      %11 = sbr.rel (0) target = $region5
    $region4: #{tpu_custom_call.1} parent=1 // pred_region
      %13 = vsyncadd [#allocation5], 0
      %s15 = sshll.u32 %s0, 4
      %s16 = int_to_ptr.hbm [resolvable:$true] %s15
      %18 = dma.hbm_to_smem %s16, 16, [#allocation2], [#allocation5]
    $region5: #{tpu_custom_call.1} parent=1 // pred_fallthru
      _
    // Predicated region
    $region6: #{tpu_custom_call.1} parent=1 // pred_check
      _
    $region7: #{tpu_custom_call.1} parent=1 // pred_check_branch
      %20 = sbr.rel (0) target = $region9
    $region8: #{tpu_custom_call.1} parent=1 // pred_region
      %22 = vsyncadd [#allocation3], 0
      %s24 = sshll.u32 %s1, 4
      %s25 = int_to_ptr.hbm [resolvable:$true] %s24
      %s26 = sshll.u32 [#allocation6], 4
      %s27 = int_to_ptr.vmem [resolvable:$true] %s26
      %29 = dma.hbm_to_vmem [thread:$0]  %s25, 128, %s27, [#allocation3]
    $region9: #{tpu_custom_call.1} parent=1 // pred_fallthru
      _
    // Predicated region
    $region10: #{tpu_custom_call.1} parent=1 // pred_check
      _
    $region11: #{tpu_custom_call.1} parent=1 // pred_check_branch
      %31 = sbr.rel (0) target = $region13
    $region12: #{tpu_custom_call.1} parent=1 // pred_region
      %33 = dma.done [#allocation5], 16
    $region13: #{tpu_custom_call.1} parent=1 // pred_fallthru
      _
    // Predicated region
    $region14: #{tpu_custom_call.1} parent=1 // pred_check
      _
    $region15: #{tpu_custom_call.1} parent=1 // pred_check_branch
      %35 = sbr.rel (0) target = $region17
    $region16: #{tpu_custom_call.1} parent=1 // pred_region
      %37 = dma.done [#allocation3], 128
    $region17: #{tpu_custom_call.1} parent=1 // pred_fallthru
      _
    %38 = sfence
    %s39 = sld [smem:[#allocation2]]
    %s40 = sld [smem:[#allocation2 + $0x1]]
    %s41 = sld [smem:[#allocation2 + $0x2]]
    %s42 = sld [smem:[#allocation2 + $0x3]]
    %s43 = sld [smem:[#allocation2 + $0x4]]
    %s44 = smul.f32 %s43, 86400.0
    %v45 = vstv %s41
    %v46 = vrcp.pop %v45
    %v47 = vmul.f32 %v45, %v46
    %v48 = vsub.f32 1.0, %v47
    %v49 = vmul.f32 %v46, %v48
    %v50 = vadd.f32 %v46, %v49
    %vm51 = vweird.f32 %v45
    %vm52 = vweird.f32 %v46
    %vm53 = vmor %vm51, %vm52
    %v54 = vsel %vm53, %v46, %v50
    %v55 = vand.u32 2147483647, %v45
    %vm56 = vcmp.eq.f32.partialorder %v55, 8.507059e+37
    %v57 = vand.u32 %v45, 2147483648
    %v58 = vor.u32 1.1754944e-38, %v57
    %v59 = vsel %vm56, %v58, %v54
    %s60 = vtos %v59
    %v61 = vlaneseq
    %v62 = vshrl.u32 %v61, 7
    %v63 = vld [vmem:[#allocation6] sm:$0xff]
    %v65 = vrot.slane %v63, 1
    %v66 = vrot.slane %v63, 2
    %v67 = vrot.slane %v63, 3
    %v68 = vrot.slane %v63, 4
    %v69 = vrot.slane %v63, 5
    %v70 = vrot.slane %v63, 6
    %v71 = vrot.slane %v63, 7
    %v72 = vperm.slane %v65, 0
    %v73 = vperm.slane %v66, 0
    %v74 = vperm.slane %v67, 0
    %v75 = vperm.slane %v68, 0
    %v76 = vperm.slane %v69, 0
    %v77 = vperm.slane %v70, 0
    %v78 = vperm.slane %v71, 0
    %v86 = vsub.f32 %v72, %v63
    %v87 = vsub.f32 %v73, %v63
    %v88 = vsub.f32 %v74, %v63
    %v89 = vsub.f32 %v75, %v63
    %v90 = vsub.f32 %v76, %v63
    %v91 = vsub.f32 %v77, %v63
    %v92 = vsub.f32 %v78, %v63
    %v93 = vstv %s44
    %v94 = vmul.f32 %v86, %v93
    %v95 = vmul.f32 %v87, %v93
    %v96 = vmul.f32 %v88, %v93
    %v97 = vmul.f32 %v89, %v93
    %v98 = vmul.f32 %v90, %v93
    %v99 = vmul.f32 %v91, %v93
    %v100 = vmul.f32 %v92, %v93
    %v101 = vmax.f32 %v94, 1.0
    %v102 = vmax.f32 %v95, 1.0
    %v103 = vmax.f32 %v96, 1.0
    %v104 = vmax.f32 %v97, 1.0
    %v105 = vmax.f32 %v98, 1.0
    %v106 = vmax.f32 %v99, 1.0
    %v107 = vmax.f32 %v100, 1.0
    %v108 = vlog2.pop %v101
    %v109 = vmul.f32 %v108, 0.6931472
    %v110 = vlog2.pop %v102
    %v111 = vmul.f32 %v110, 0.6931472
    %v112 = vlog2.pop %v103
    %v113 = vmul.f32 %v112, 0.6931472
    %v114 = vlog2.pop %v104
    %v115 = vmul.f32 %v114, 0.6931472
    %v116 = vlog2.pop %v105
    %v117 = vmul.f32 %v116, 0.6931472
    %v118 = vlog2.pop %v106
    %v119 = vmul.f32 %v118, 0.6931472
    %v120 = vlog2.pop %v107
    %v121 = vmul.f32 %v120, 0.6931472
    %v122 = vstv %s40
    %v123 = vmul.f32 %v122, 0.0
    %v124 = vstv %s39
    %v125 = vadd.f32 %v123, %v124
    %v126 = vsub.f32 0.0, %v125
    %vm127 = vcmp.lt.s32.totalorder %v62, 1
    %v128 = vmul.f32 %v126, %v109
    %v129 = vmul.f32 %v128, 1.442695
    %v130 = vpow.pop %v129
    %v131 = vsel %vm127, %v130, 0.0
    %v132 = vrot.slane %v131, 4
    %v133 = vadd.f32 %v131, %v132
    %v134 = vrot.slane %v133, 2
    %v135 = vadd.f32 %v133, %v134
    %v136 = vrot.slane %v135, 1
    %v137 = vadd.f32 %v135, %v136
    %vm138 = vcmp.eq.s32.totalorder %v62, 1
    %v139 = vsel %vm138, %v137, 0.0
    %v140 = vmul.f32 %v122, %v139
    %v141 = vadd.f32 %v140, %v124
    %v142 = vsub.f32 0.0, %v141
    %vm143 = vcmp.lt.s32.totalorder %v62, 2
    %v144 = vmul.f32 %v142, %v111
    %v145 = vmul.f32 %v144, 1.442695
    %v146 = vpow.pop %v145
    %v147 = vsel %vm143, %v146, 0.0
    %v148 = vrot.slane %v147, 4
    %v149 = vadd.f32 %v147, %v148
    %v150 = vrot.slane %v149, 2
    %v151 = vadd.f32 %v149, %v150
    %v152 = vrot.slane %v151, 1
    %v153 = vadd.f32 %v151, %v152
    %vm154 = vcmp.eq.s32.totalorder %v62, 2
    %v155 = vsel %vm154, %v153, %v139
    %v156 = vmul.f32 %v122, %v155
    %v157 = vadd.f32 %v156, %v124
    %v158 = vsub.f32 0.0, %v157
    %vm159 = vcmp.lt.s32.totalorder %v62, 3
    %v160 = vmul.f32 %v158, %v113
    %v161 = vmul.f32 %v160, 1.442695
    %v162 = vpow.pop %v161
    %v163 = vsel %vm159, %v162, 0.0
    %v164 = vrot.slane %v163, 4
    %v165 = vadd.f32 %v163, %v164
    %v166 = vrot.slane %v165, 2
    %v167 = vadd.f32 %v165, %v166
    %v168 = vrot.slane %v167, 1
    %v169 = vadd.f32 %v167, %v168
    %vm170 = vcmp.eq.s32.totalorder %v62, 3
    %v171 = vsel %vm170, %v169, %v155
    %v172 = vmul.f32 %v122, %v171
    %v173 = vadd.f32 %v172, %v124
    %v174 = vsub.f32 0.0, %v173
    %vm175 = vcmp.lt.s32.totalorder %v62, 4
    %v176 = vmul.f32 %v174, %v115
    %v177 = vmul.f32 %v176, 1.442695
    %v178 = vpow.pop %v177
    %v179 = vsel %vm175, %v178, 0.0
    %v180 = vrot.slane %v179, 4
    %v181 = vadd.f32 %v179, %v180
    %v182 = vrot.slane %v181, 2
    %v183 = vadd.f32 %v181, %v182
    %v184 = vrot.slane %v183, 1
    %v185 = vadd.f32 %v183, %v184
    %vm186 = vcmp.eq.s32.totalorder %v62, 4
    %v187 = vsel %vm186, %v185, %v171
    %v188 = vmul.f32 %v122, %v187
    %v189 = vadd.f32 %v188, %v124
    %v190 = vsub.f32 0.0, %v189
    %vm191 = vcmp.lt.s32.totalorder %v62, 5
    %v192 = vmul.f32 %v190, %v117
    %v193 = vmul.f32 %v192, 1.442695
    %v194 = vpow.pop %v193
    %v195 = vsel %vm191, %v194, 0.0
    %v196 = vrot.slane %v195, 4
    %v197 = vadd.f32 %v195, %v196
    %v198 = vrot.slane %v197, 2
    %v199 = vadd.f32 %v197, %v198
    %v200 = vrot.slane %v199, 1
    %v201 = vadd.f32 %v199, %v200
    %vm202 = vcmp.eq.s32.totalorder %v62, 5
    %v203 = vsel %vm202, %v201, %v187
    %v204 = vmul.f32 %v122, %v203
    %v205 = vadd.f32 %v204, %v124
    %v206 = vsub.f32 0.0, %v205
    %vm207 = vcmp.lt.s32.totalorder %v62, 6
    %v208 = vmul.f32 %v206, %v119
    %v209 = vmul.f32 %v208, 1.442695
    %v210 = vpow.pop %v209
    %v211 = vsel %vm207, %v210, 0.0
    %v212 = vrot.slane %v211, 4
    %v213 = vadd.f32 %v211, %v212
    %v214 = vrot.slane %v213, 2
    %v215 = vadd.f32 %v213, %v214
    %v216 = vrot.slane %v215, 1
    %v217 = vadd.f32 %v215, %v216
    %vm218 = vcmp.eq.s32.totalorder %v62, 6
    %v219 = vsel %vm218, %v217, %v203
    %v220 = vmul.f32 %v122, %v219
    %v221 = vadd.f32 %v220, %v124
    %v222 = vsub.f32 0.0, %v221
    %vm223 = vcmp.lt.s32.totalorder %v62, 7
    %v224 = vmul.f32 %v222, %v121
    %v225 = vmul.f32 %v224, 1.442695
    %v226 = vpow.pop %v225
    %v227 = vsel %vm223, %v226, 0.0
    %v228 = vrot.slane %v227, 4
    %v229 = vadd.f32 %v227, %v228
    %v230 = vrot.slane %v229, 2
    %v231 = vadd.f32 %v229, %v230
    %v232 = vrot.slane %v231, 1
    %v233 = vadd.f32 %v231, %v232
    %vm234 = vcmp.eq.s32.totalorder %v62, 7
    %v235 = vsel %vm234, %v233, %v219
    %v236 = vlog2.pop %v235
    %v237 = vmul.f32 %v236, 0.6931472
    %v238 = vstv %s42
    %v239 = vsub.f32 %v238, %v237
    %v240 = vstv %s60
    %v241 = vmul.f32 %v239, %v240
    %v242 = vmul.f32 %v241, 1.442695
    %v243 = vpow.pop %v242
    %v244 = vadd.f32 %v243, 1.0
    %v245 = vrcp.pop %v244
    %v246 = vmul.f32 %v244, %v245
    %v247 = vsub.f32 1.0, %v246
    %v248 = vmul.f32 %v245, %v247
    %v249 = vadd.f32 %v245, %v248
    %vm250 = vweird.f32 %v244
    %vm251 = vweird.f32 %v245
    %vm252 = vmor %vm250, %vm251
    %v253 = vsel %vm252, %v245, %v249
    %v254 = vand.u32 2147483647, %v244
    %vm255 = vcmp.eq.f32.partialorder %v254, 8.507059e+37
    %v256 = vand.u32 %v244, 2147483648
    %v257 = vor.u32 1.1754944e-38, %v256
    %v258 = vsel %vm255, %v257, %v253
    %v259 = vmul.f32 1.0, %v258
    %260 = vst [vmem:[#allocation7 - $0x1] sm:$0xfe] %v259
    // Predicated region
    $region18: #{tpu_custom_call.1} parent=1 // pred_check
      _
    $region19: #{tpu_custom_call.1} parent=1 // pred_check_branch
      %262 = sbr.rel (0) target = $region21
    $region20: #{tpu_custom_call.1} parent=1 // pred_region
      %264 = vsyncadd [#allocation4], 0
      %s266 = sshll.u32 [#allocation7], 4
      %s267 = int_to_ptr.vmem [resolvable:$true] %s266
      %s268 = sshll.u32 %s2, 4
      %s269 = int_to_ptr.hbm [resolvable:$true] %s268
      %271 = dma.vmem_to_hbm [thread:$0]  %s267, 128, %s269, [#allocation4]
    $region21: #{tpu_custom_call.1} parent=1 // pred_fallthru
      _
    // Predicated region
    $region22: #{tpu_custom_call.1} parent=1 // pred_check
      _
    $region23: #{tpu_custom_call.1} parent=1 // pred_check_branch
      %273 = sbr.rel (0) target = $region25
    $region24: #{tpu_custom_call.1} parent=1 // pred_region
      %275 = dma.done [#allocation4], 128
    $region25: #{tpu_custom_call.1} parent=1 // pred_fallthru
      _
    %276 = vsyncpa [#allocation3], 1
    %277 = vsyncpa [#allocation4], 1
    %278 = vsyncpa [#allocation5], 1

</llo_original>
